<compile_context>
chip_gen: v7x
topology: tpu7x:2x2x1
jax: 0.10.0
libtpu: 0.0.40
codegen_flags: <defaults>
</compile_context>

<pallas_src>
import functools

import jax
import jax.numpy as jnp
from jax.experimental import pallas as pl
from jax.experimental.pallas import tpu as pltpu


# ---------------------------------------------------------------------------
# Pallas kernel: fused [grouped Conv1d(k=3,p=1) + ReLU] x 2 for one group
# ---------------------------------------------------------------------------
def _fused_gconv_kernel(x_ref, w1_ref, b1_ref, w2_ref, b2_ref, o_ref):
    # x_ref  : (bb, T, Cin1_g)   f32   -- bb batches of group g, channels-last
    # w1_ref : (3, Cin1_g, Cout_g) bf16
    # b1_ref : (1, Cout_g)       f32
    # w2_ref : (3, Cout_g, Cout_g) bf16
    # b2_ref : (1, Cout_g)       f32
    # o_ref  : (bb, T, Cout_g)   f32
    bb, T, cin1 = x_ref.shape
    cout = o_ref.shape[-1]
    n = bb * T

    def conv3_relu(v, w_ref, b_ref):
        # v: (n, C) f32, rows ordered (batch-major, time-minor).  Conv taps are
        # built by rolling along the sublane (row) axis; the wrap rows of each
        # roll are exactly the per-batch time boundaries, so zero-masking them
        # gives both 'same' padding and batch isolation.
        C = v.shape[-1]
        t_idx = jax.lax.broadcasted_iota(jnp.int32, (bb, T, C), 1).reshape(n, C)
        v_prev = jnp.where(t_idx == 0, 0.0, pltpu.roll(v, 1, 0))
        v_next = jnp.where(t_idx == T - 1, 0.0, pltpu.roll(v, n - 1, 0))

        def mm(a, k):  # MXU matmul in bf16, f32 accumulation
            return jnp.dot(a.astype(jnp.bfloat16), w_ref[k],
                           preferred_element_type=jnp.float32)

        acc = mm(v_prev, 0) + mm(v, 1) + mm(v_next, 2)
        acc = acc + b_ref[...]                       # (1, Cout) broadcast, f32
        return jnp.maximum(acc, 0.0)

    x = x_ref[...].reshape(n, cin1)
    h = conv3_relu(x, w1_ref, b1_ref)                # (n, Cout) stays in VMEM
    y = conv3_relu(h, w2_ref, b2_ref)                # (n, Cout)
    o_ref[...] = y.reshape(bb, T, cout).astype(o_ref.dtype)


def fused_grouped_conv_relu_x2(x_bgtc, w1, b1, w2, b2, *, batch_block=None):
    """Fused (conv1+ReLU+conv2+ReLU), grouped, channels-last.

    x_bgtc: [B, G, T, Cin1_g]
    w1: [G, 3, Cin1_g, Cout_g]   b1: [G, 1, Cout_g]
    w2: [G, 3, Cout_g, Cout_g]   b2: [G, 1, Cout_g]
    returns [B, G, T, Cout_g] (f32).
    """
    B, G, T, cin1 = x_bgtc.shape
    cout = w1.shape[-1]
    if batch_block is None:
        batch_block = B
    assert B % batch_block == 0
    nb = B // batch_block

    # bf16 weights: halves weight DMA and uses the fast MXU path; bias stays f32.
    w1 = w1.astype(jnp.bfloat16)
    w2 = w2.astype(jnp.bfloat16)
    b1 = b1.astype(jnp.float32)
    b2 = b2.astype(jnp.float32)

    # Group axis outermost -> weight/bias block index is constant across the
    # inner batch-tile loop, so their DMAs are skipped after the first step.
    return pl.pallas_call(
        _fused_gconv_kernel,
        out_shape=jax.ShapeDtypeStruct((B, G, T, cout), jnp.float32),
        grid=(G, nb),
        in_specs=[
            pl.BlockSpec((batch_block, None, T, cin1), lambda g, b: (b, g, 0, 0)),
            pl.BlockSpec((None, 3, cin1, cout), lambda g, b: (g, 0, 0, 0)),
            pl.BlockSpec((None, 1, cout), lambda g, b: (g, 0, 0)),
            pl.BlockSpec((None, 3, cout, cout), lambda g, b: (g, 0, 0, 0)),
            pl.BlockSpec((None, 1, cout), lambda g, b: (g, 0, 0)),
        ],
        out_specs=pl.BlockSpec((batch_block, None, T, cout),
                               lambda g, b: (b, g, 0, 0)),
        compiler_params=pltpu.CompilerParams(
            dimension_semantics=("parallel", "parallel")),
    )(x_bgtc, w1, b1, w2, b2)


# ---------------------------------------------------------------------------
# Layout helpers (NCW <-> grouped channels-last) and pure-JAX reference
# ---------------------------------------------------------------------------
def ncw_to_grouped(x_ncw, groups):
    B, C, T = x_ncw.shape
    cg = C // groups
    return x_ncw.reshape(B, groups, cg, T).transpose(0, 1, 3, 2)  # [B,G,T,Cg]


def grouped_to_ncw(x_bgtc):
    B, G, T, Cg = x_bgtc.shape
    return x_bgtc.transpose(0, 1, 3, 2).reshape(B, G * Cg, T)


def ref_gconv_relu(x_ncw, w_gkic, b_g1c):
    """Reference grouped conv (f32) using lax.conv_general_dilated (NCW)."""
    G, K, Cin_g, Cout_g = w_gkic.shape
    w_oiw = w_gkic.transpose(0, 3, 2, 1).reshape(G * Cout_g, Cin_g, K)
    y = jax.lax.conv_general_dilated(
        x_ncw, w_oiw,
        window_strides=(1,), padding=((1, 1),),
        dimension_numbers=("NCH", "OIH", "NCH"),
        feature_group_count=G)
    y = y + b_g1c.reshape(1, G * Cout_g, 1)
    return jnp.maximum(y, 0.0)


# ---------------------------------------------------------------------------
# TCANet forward (inference mode) — fused Pallas conv stack + JAX glue
# ---------------------------------------------------------------------------
def tcanet_forward(params, features, video_second, proposals, gt_boxes,
                   temporal_mask):
    G = 4
    # x_1d_b_f: both grouped conv+ReLU layers fused into one Pallas kernel.
    x = ncw_to_grouped(features, G)                              # [B,G,T,feat/G]
    feats = fused_grouped_conv_relu_x2(
        x, params["w1"], params["b1"], params["w2"], params["b2"])  # [B,G,T,128]
    # feats stays in the lane-dense grouped channels-last layout; a logical NCW
    # [B, 512, T] view is grouped_to_ncw(feats) if a consumer strictly needs it.

    # TODO(synk): LocalGlobalTemporalEncoder layers not defined in source; skipped.

    B, P, _ = proposals.shape
    batch_col = jnp.broadcast_to(
        jnp.arange(B, dtype=proposals.dtype)[:, None], (B, P))
    proposals = proposals.at[:, :, 2].set(batch_col)
    props_flat = proposals.reshape(B * P, 3)
    select_mask = (props_flat[:, 0] + props_flat[:, 1]) > 0
    batch_idx = props_flat[:, 2].astype(jnp.int32)
    video_sec_per_prop = video_second[batch_idx].astype(jnp.float32)

    # TODO(synk): TemporalBoundaryRegressor (tbr1/2/3) not defined in source and
    # requires dynamic-shape boolean compaction; per-proposal feature gathering
    # is deferred to that stage (batch_idx is arange(B) repeated P times, so no
    # [B*P, 512, T] copy is materialized here).
    return {
        "features": feats,                      # [B, G, T, 128] channels-last
        "proposals_flat": props_flat,
        "select_mask": select_mask,
        "proposal_batch_idx": batch_idx,
        "video_sec_per_proposal": video_sec_per_prop,
    }


# ---------------------------------------------------------------------------
# Deterministic parameter init (shapes follow the module __init__)
# ---------------------------------------------------------------------------
def init_params(key, feat_dim, hidden=512, groups=4):
    k1, k2, k3, k4 = jax.random.split(key, 4)
    cin1 = feat_dim // groups
    cin2 = hidden // groups
    cout = hidden // groups
    w1 = jax.random.normal(k1, (groups, 3, cin1, cout), jnp.float32) * 0.05
    b1 = jax.random.normal(k2, (groups, 1, cout), jnp.float32) * 0.01
    w2 = jax.random.normal(k3, (groups, 3, cin2, cout), jnp.float32) * 0.05
    b2 = jax.random.normal(k4, (groups, 1, cout), jnp.float32) * 0.01
    return {"w1": w1, "b1": b1, "w2": w2, "b2": b2}


if __name__ == "__main__":
    key = jax.random.PRNGKey(0)
    B, feat_dim, T, P = 2, 16, 16, 8   # small synthetic shapes

    kf, kp, kg, kv, kparam = jax.random.split(key, 5)
    features = jax.random.normal(kf, (B, feat_dim, T), jnp.float32)   # NCW
    proposals = jax.random.uniform(kp, (B, P, 3), jnp.float32)
    gt_boxes = jax.random.uniform(kg, (B, P, 2), jnp.float32)
    video_second = jax.random.uniform(kv, (B,), jnp.float32) * 100.0
    temporal_mask = jnp.ones((B, T), jnp.bool_)

    params = init_params(kparam, feat_dim)

    out = jax.jit(functools.partial(tcanet_forward, params))(
        features, video_second, proposals, gt_boxes, temporal_mask)
    jax.block_until_ready(out)

    # Correctness check of the fused Pallas conv stack against the f32 lax
    # reference (bf16 matmuls inside the kernel -> relaxed tolerances).
    ref1 = ref_gconv_relu(features, params["w1"], params["b1"])
    ref2 = ref_gconv_relu(ref1, params["w2"], params["b2"])
    got = grouped_to_ncw(out["features"])
    assert jnp.allclose(got, ref2, atol=2e-2, rtol=2e-2), (
        "Pallas fused grouped conv mismatch vs reference")

    print("KERNEL_OK")
</pallas_src>

<mosaic_0001>
module attributes {stable_mosaic.version = 11 : i64} {
  func.func @_fused_gconv_kernel(%arg0: i32, %arg1: i32, %arg2: memref<2x1x16x4xf32, #tpu.memory_space<vmem>>, %arg3: memref<1x3x4x128xbf16, #tpu.memory_space<vmem>>, %arg4: memref<1x1x128xf32, #tpu.memory_space<vmem>>, %arg5: memref<1x3x128x128xbf16, #tpu.memory_space<vmem>>, %arg6: memref<1x1x128xf32, #tpu.memory_space<vmem>>, %arg7: memref<2x1x16x128xf32, #tpu.memory_space<vmem>>) attributes {dimension_semantics = [#tpu.dimension_semantics<parallel>, #tpu.dimension_semantics<parallel>], iteration_bounds = array<i64: 4, 1>, scalar_prefetch = 0 : i64, scratch_operands = 0 : i64, tpu.core_type = #tpu.core_type<tc>, window_params = [{transform_indices = @transform_0, window_bounds = array<i64: 2, 1, 16, 4>}, {transform_indices = @transform_1, window_bounds = array<i64: 1, 3, 4, 128>}, {transform_indices = @transform_2, window_bounds = array<i64: 1, 1, 128>}, {transform_indices = @transform_3, window_bounds = array<i64: 1, 3, 128, 128>}, {transform_indices = @transform_4, window_bounds = array<i64: 1, 1, 128>}, {transform_indices = @transform_5, window_bounds = array<i64: 2, 1, 16, 128>}]} {
    %c0 = arith.constant 0 : index
    %c0_0 = arith.constant 0 : index
    %c0_1 = arith.constant 0 : index
    %c0_2 = arith.constant 0 : index
    %0 = vector.load %arg2[%c0, %c0_0, %c0_1, %c0_2] : memref<2x1x16x4xf32, #tpu.memory_space<vmem>>, vector<2x1x16x4xf32>
    %1 = vector.shape_cast %0 : vector<2x1x16x4xf32> to vector<2x16x4xf32>
    %2 = vector.shape_cast %1 : vector<2x16x4xf32> to vector<32x4xf32>
    %3 = tpu.iota {dimensions = array<i32: 1>} : vector<2x16x4xi32>
    %4 = vector.shape_cast %3 : vector<2x16x4xi32> to vector<32x4xi32>
    %c0_i32 = arith.constant 0 : i32
    %5 = vector.broadcast %c0_i32 : i32 to vector<32x4xi32>
    %6 = arith.cmpi eq, %4, %5 : vector<32x4xi32>
    %c1_i32 = arith.constant 1 : i32
    %7 = tpu.dynamic_rotate %2 by %c1_i32 dim 0 : vector<32x4xf32>, i32 -> vector<32x4xf32>
    %cst = arith.constant 0.000000e+00 : f32
    %8 = vector.broadcast %cst : f32 to vector<32x4xf32>
    %9 = arith.select %6, %8, %7 : vector<32x4xi1>, vector<32x4xf32>
    %c15_i32 = arith.constant 15 : i32
    %10 = vector.broadcast %c15_i32 : i32 to vector<32x4xi32>
    %11 = arith.cmpi eq, %4, %10 : vector<32x4xi32>
    %c31_i32 = arith.constant 31 : i32
    %12 = tpu.dynamic_rotate %2 by %c31_i32 dim 0 : vector<32x4xf32>, i32 -> vector<32x4xf32>
    %cst_3 = arith.constant 0.000000e+00 : f32
    %13 = vector.broadcast %cst_3 : f32 to vector<32x4xf32>
    %14 = arith.select %11, %13, %12 : vector<32x4xi1>, vector<32x4xf32>
    %15 = arith.truncf %9 : vector<32x4xf32> to vector<32x4xbf16>
    %c0_4 = arith.constant 0 : index
    %c0_5 = arith.constant 0 : index
    %c0_6 = arith.constant 0 : index
    %c0_7 = arith.constant 0 : index
    %16 = vector.load %arg3[%c0_4, %c0_5, %c0_6, %c0_7] : memref<1x3x4x128xbf16, #tpu.memory_space<vmem>>, vector<1x1x4x128xbf16>
    %17 = vector.shape_cast %16 : vector<1x1x4x128xbf16> to vector<4x128xbf16>
    %cst_8 = arith.constant dense<0.000000e+00> : vector<32x128xf32>
    %18 = tpu.matmul %15, %17, %cst_8 {dimension_numbers = #tpu.dot_dimension_numbers<[1], [0], [0], [1], [0, 0, 1, 1], [], []>} : vector<32x4xbf16>, vector<4x128xbf16>, vector<32x128xf32> -> vector<32x128xf32>
    %19 = arith.truncf %2 : vector<32x4xf32> to vector<32x4xbf16>
    %c0_9 = arith.constant 0 : index
    %c1 = arith.constant 1 : index
    %c0_10 = arith.constant 0 : index
    %c0_11 = arith.constant 0 : index
    %20 = vector.load %arg3[%c0_9, %c1, %c0_10, %c0_11] : memref<1x3x4x128xbf16, #tpu.memory_space<vmem>>, vector<1x1x4x128xbf16>
    %21 = vector.shape_cast %20 : vector<1x1x4x128xbf16> to vector<4x128xbf16>
    %cst_12 = arith.constant dense<0.000000e+00> : vector<32x128xf32>
    %22 = tpu.matmul %19, %21, %cst_12 {dimension_numbers = #tpu.dot_dimension_numbers<[1], [0], [0], [1], [0, 0, 1, 1], [], []>} : vector<32x4xbf16>, vector<4x128xbf16>, vector<32x128xf32> -> vector<32x128xf32>
    %23 = arith.addf %18, %22 : vector<32x128xf32>
    %24 = arith.truncf %14 : vector<32x4xf32> to vector<32x4xbf16>
    %c0_13 = arith.constant 0 : index
    %c2 = arith.constant 2 : index
    %c0_14 = arith.constant 0 : index
    %c0_15 = arith.constant 0 : index
    %25 = vector.load %arg3[%c0_13, %c2, %c0_14, %c0_15] : memref<1x3x4x128xbf16, #tpu.memory_space<vmem>>, vector<1x1x4x128xbf16>
    %26 = vector.shape_cast %25 : vector<1x1x4x128xbf16> to vector<4x128xbf16>
    %cst_16 = arith.constant dense<0.000000e+00> : vector<32x128xf32>
    %27 = tpu.matmul %24, %26, %cst_16 {dimension_numbers = #tpu.dot_dimension_numbers<[1], [0], [0], [1], [0, 0, 1, 1], [], []>} : vector<32x4xbf16>, vector<4x128xbf16>, vector<32x128xf32> -> vector<32x128xf32>
    %28 = arith.addf %23, %27 : vector<32x128xf32>
    %c0_17 = arith.constant 0 : index
    %c0_18 = arith.constant 0 : index
    %c0_19 = arith.constant 0 : index
    %29 = vector.load %arg4[%c0_17, %c0_18, %c0_19] : memref<1x1x128xf32, #tpu.memory_space<vmem>>, vector<1x1x128xf32>
    %30 = vector.shape_cast %29 : vector<1x1x128xf32> to vector<1x128xf32>
    %31 = vector.broadcast %30 : vector<1x128xf32> to vector<32x128xf32>
    %32 = arith.addf %28, %31 : vector<32x128xf32>
    %cst_20 = arith.constant 0.000000e+00 : f32
    %33 = vector.broadcast %cst_20 : f32 to vector<32x128xf32>
    %34 = arith.maximumf %32, %33 : vector<32x128xf32>
    %35 = tpu.iota {dimensions = array<i32: 1>} : vector<2x16x128xi32>
    %36 = vector.shape_cast %35 : vector<2x16x128xi32> to vector<32x128xi32>
    %c0_i32_21 = arith.constant 0 : i32
    %37 = vector.broadcast %c0_i32_21 : i32 to vector<32x128xi32>
    %38 = arith.cmpi eq, %36, %37 : vector<32x128xi32>
    %c1_i32_22 = arith.constant 1 : i32
    %39 = tpu.dynamic_rotate %34 by %c1_i32_22 dim 0 : vector<32x128xf32>, i32 -> vector<32x128xf32>
    %cst_23 = arith.constant 0.000000e+00 : f32
    %40 = vector.broadcast %cst_23 : f32 to vector<32x128xf32>
    %41 = arith.select %38, %40, %39 : vector<32x128xi1>, vector<32x128xf32>
    %c15_i32_24 = arith.constant 15 : i32
    %42 = vector.broadcast %c15_i32_24 : i32 to vector<32x128xi32>
    %43 = arith.cmpi eq, %36, %42 : vector<32x128xi32>
    %c31_i32_25 = arith.constant 31 : i32
    %44 = tpu.dynamic_rotate %34 by %c31_i32_25 dim 0 : vector<32x128xf32>, i32 -> vector<32x128xf32>
    %cst_26 = arith.constant 0.000000e+00 : f32
    %45 = vector.broadcast %cst_26 : f32 to vector<32x128xf32>
    %46 = arith.select %43, %45, %44 : vector<32x128xi1>, vector<32x128xf32>
    %47 = arith.truncf %41 : vector<32x128xf32> to vector<32x128xbf16>
    %c0_27 = arith.constant 0 : index
    %c0_28 = arith.constant 0 : index
    %c0_29 = arith.constant 0 : index
    %c0_30 = arith.constant 0 : index
    %48 = vector.load %arg5[%c0_27, %c0_28, %c0_29, %c0_30] : memref<1x3x128x128xbf16, #tpu.memory_space<vmem>>, vector<1x1x128x128xbf16>
    %49 = vector.shape_cast %48 : vector<1x1x128x128xbf16> to vector<128x128xbf16>
    %cst_31 = arith.constant dense<0.000000e+00> : vector<32x128xf32>
    %50 = tpu.matmul %47, %49, %cst_31 {dimension_numbers = #tpu.dot_dimension_numbers<[1], [0], [0], [1], [0, 0, 1, 1], [], []>} : vector<32x128xbf16>, vector<128x128xbf16>, vector<32x128xf32> -> vector<32x128xf32>
    %51 = arith.truncf %34 : vector<32x128xf32> to vector<32x128xbf16>
    %c0_32 = arith.constant 0 : index
    %c1_33 = arith.constant 1 : index
    %c0_34 = arith.constant 0 : index
    %c0_35 = arith.constant 0 : index
    %52 = vector.load %arg5[%c0_32, %c1_33, %c0_34, %c0_35] : memref<1x3x128x128xbf16, #tpu.memory_space<vmem>>, vector<1x1x128x128xbf16>
    %53 = vector.shape_cast %52 : vector<1x1x128x128xbf16> to vector<128x128xbf16>
    %cst_36 = arith.constant dense<0.000000e+00> : vector<32x128xf32>
    %54 = tpu.matmul %51, %53, %cst_36 {dimension_numbers = #tpu.dot_dimension_numbers<[1], [0], [0], [1], [0, 0, 1, 1], [], []>} : vector<32x128xbf16>, vector<128x128xbf16>, vector<32x128xf32> -> vector<32x128xf32>
    %55 = arith.addf %50, %54 : vector<32x128xf32>
    %56 = arith.truncf %46 : vector<32x128xf32> to vector<32x128xbf16>
    %c0_37 = arith.constant 0 : index
    %c2_38 = arith.constant 2 : index
    %c0_39 = arith.constant 0 : index
    %c0_40 = arith.constant 0 : index
    %57 = vector.load %arg5[%c0_37, %c2_38, %c0_39, %c0_40] : memref<1x3x128x128xbf16, #tpu.memory_space<vmem>>, vector<1x1x128x128xbf16>
    %58 = vector.shape_cast %57 : vector<1x1x128x128xbf16> to vector<128x128xbf16>
    %cst_41 = arith.constant dense<0.000000e+00> : vector<32x128xf32>
    %59 = tpu.matmul %56, %58, %cst_41 {dimension_numbers = #tpu.dot_dimension_numbers<[1], [0], [0], [1], [0, 0, 1, 1], [], []>} : vector<32x128xbf16>, vector<128x128xbf16>, vector<32x128xf32> -> vector<32x128xf32>
    %60 = arith.addf %55, %59 : vector<32x128xf32>
    %c0_42 = arith.constant 0 : index
    %c0_43 = arith.constant 0 : index
    %c0_44 = arith.constant 0 : index
    %61 = vector.load %arg6[%c0_42, %c0_43, %c0_44] : memref<1x1x128xf32, #tpu.memory_space<vmem>>, vector<1x1x128xf32>
    %62 = vector.shape_cast %61 : vector<1x1x128xf32> to vector<1x128xf32>
    %63 = vector.broadcast %62 : vector<1x128xf32> to vector<32x128xf32>
    %64 = arith.addf %60, %63 : vector<32x128xf32>
    %cst_45 = arith.constant 0.000000e+00 : f32
    %65 = vector.broadcast %cst_45 : f32 to vector<32x128xf32>
    %66 = arith.maximumf %64, %65 : vector<32x128xf32>
    %67 = vector.shape_cast %66 : vector<32x128xf32> to vector<2x16x128xf32>
    %c0_46 = arith.constant 0 : index
    %c0_47 = arith.constant 0 : index
    %c0_48 = arith.constant 0 : index
    %c0_49 = arith.constant 0 : index
    %68 = vector.load %arg7[%c0_46, %c0_47, %c0_48, %c0_49] : memref<2x1x16x128xf32, #tpu.memory_space<vmem>>, vector<2x1x16x128xf32>
    %69 = vector.shape_cast %68 : vector<2x1x16x128xf32> to vector<2x16x128xf32>
    %70 = vector.shape_cast %67 : vector<2x16x128xf32> to vector<2x1x16x128xf32>
    tpu.vector_store %arg7[%c0_46, %c0_47, %c0_48, %c0_49], %70 {strides = array<i32>} : memref<2x1x16x128xf32, #tpu.memory_space<vmem>>, vector<2x1x16x128xf32>,
    return
  }
  func.func @transform_0(%arg0: i32, %arg1: i32) -> (i32, i32, i32, i32) {
    %c0_i32 = arith.constant 0 : i32
    %c0_i32_0 = arith.constant 0 : i32
    %c0_i32_1 = arith.constant 0 : i32
    return %arg1, %arg0, %c0_i32, %c0_i32_0 : i32, i32, i32, i32
  }
  func.func @transform_1(%arg0: i32, %arg1: i32) -> (i32, i32, i32, i32) {
    %c0_i32 = arith.constant 0 : i32
    %c0_i32_0 = arith.constant 0 : i32
    %c0_i32_1 = arith.constant 0 : i32
    %c0_i32_2 = arith.constant 0 : i32
    return %arg0, %c0_i32, %c0_i32_0, %c0_i32_1 : i32, i32, i32, i32
  }
  func.func @transform_2(%arg0: i32, %arg1: i32) -> (i32, i32, i32) {
    %c0_i32 = arith.constant 0 : i32
    %c0_i32_0 = arith.constant 0 : i32
    %c0_i32_1 = arith.constant 0 : i32
    return %arg0, %c0_i32, %c0_i32_0 : i32, i32, i32
  }
  func.func @transform_3(%arg0: i32, %arg1: i32) -> (i32, i32, i32, i32) {
    %c0_i32 = arith.constant 0 : i32
    %c0_i32_0 = arith.constant 0 : i32
    %c0_i32_1 = arith.constant 0 : i32
    %c0_i32_2 = arith.constant 0 : i32
    return %arg0, %c0_i32, %c0_i32_0, %c0_i32_1 : i32, i32, i32, i32
  }
  func.func @transform_4(%arg0: i32, %arg1: i32) -> (i32, i32, i32) {
    %c0_i32 = arith.constant 0 : i32
    %c0_i32_0 = arith.constant 0 : i32
    %c0_i32_1 = arith.constant 0 : i32
    return %arg0, %c0_i32, %c0_i32_0 : i32, i32, i32
  }
  func.func @transform_5(%arg0: i32, %arg1: i32) -> (i32, i32, i32, i32) {
    %c0_i32 = arith.constant 0 : i32
    %c0_i32_0 = arith.constant 0 : i32
    %c0_i32_1 = arith.constant 0 : i32
    return %arg1, %arg0, %c0_i32, %c0_i32_0 : i32, i32, i32, i32
  }
}

</mosaic_0001>

<llo_original>
// kernel: tcanet_forward.1
$region0: #{tcanet_forward.1}
  #allocation0 [shape = 'u32[]', space=smem, size = 0x4, offset = 0x4, fixed_abs, tag = 'smem constant byte address 0x4 - core index']
  #allocation1 [shape = 'u32[144,128]{1,0:T(1,128)}', space=vmem, size = 0x12000, scoped, tag = 'internal scratch']
  #allocation7 [shape = 's32[]', space=sflag, size = 0x4, offset = 0, fixed_abs, tag = 'sflag constant byte address 0x0 - dummy sync flag']
  %s0 = inlined_call_operand.vmem [shape: f32[2,4,16,4], index: 0, kind: input, shape index: {}]
  %s1 = inlined_call_operand.vmem [shape: bf16[4,3,4,128], index: 1, kind: input, shape index: {}]
  %s2 = inlined_call_operand.vmem [shape: f32[4,1,128], index: 2, kind: input, shape index: {}]
  %s3 = inlined_call_operand.hbm [shape: bf16[4,3,128,128], index: 3, kind: input, shape index: {}]
  %s4 = inlined_call_operand.vmem [shape: f32[4,1,128], index: 4, kind: input, shape index: {}]
  %s5 = inlined_call_operand.hbm [shape: f32[2,4,16,128], index: 5, kind: output, shape index: {}]
  %s6 = sld [smem:[#allocation0]]
  $region95: #{tcanet_forward.1} parent=0
    _
  %s8 = ssub.s32 1, %s6
  %s9 = scalar_select 0, %s8, %s6
  $region1: #{tcanet_forward.1} parent=0
    #allocation2 [shape = 'u8[32768]{0}', space=vmem, size = 0x8000, scoped, tag = 'input window, operand 0']
    #allocation3 [shape = 'u8[196608]{0}', space=vmem, size = 0x30000, scoped, tag = 'input window, operand 3']
    #allocation4 [shape = 's32[2]{0}', space=sflag, size = 0x8, scoped, tag = 'scoped memory for tcanet_forward.1']
    #allocation5 [shape = 's32[2]{0}', space=sflag, size = 0x8, scoped, tag = 'scoped memory for tcanet_forward.1']
    #allocation6 [shape = 'u8[32768]{0}', space=vmem, size = 0x8000, scoped, tag = 'output window, operand 0']
    %10 = vsyncpa [#allocation4], 0
    %s11 = scalar_lea.sflag [#allocation4], 1
    %12 = vsyncpa %s11, 0
    %13 = vsyncpa [#allocation5], 0
    %s14 = scalar_lea.sflag [#allocation5], 1
    %15 = vsyncpa %s14, 0
    loop: start=0, step=1, limit=6
    $region2: #{tcanet_forward.1} parent=1 // loop_pre_header
      _
    $region3: #{tcanet_forward.1} parent=1 // loop_header
      %s17 = sphi 0, %s21
      %p18 = scmp.ge.s32.totalorder %s17, 6
      %s24 = sphi 0, %s36
      %s25 = sphi 0, %s32
      %s26 = sphi 0, %s24
      %s27 = sphi 0, %s25
      %s28 = sphi 0, %s26
      %s29 = sphi 0, %s27
      %s41 = sphi 0, %s43
      %s44 = sphi 0, %s41
      %s45 = sphi 0, %s44
      %s61 = sphi 0, %s45
      %s67 = sphi 0, %s69
      %s70 = sphi 0, %s67
      %s71 = sphi 0, %s70
      %s87 = sphi 0, %s71
      %s93 = sphi 0, %s95
      %s96 = sphi 0, %s93
      %s97 = sphi 0, %s96
      %s113 = sphi 0, %s97
      %s119 = sphi 0, %s121
      %s122 = sphi 0, %s119
      %s123 = sphi 0, %s122
      %s139 = sphi 0, %s123
      %s145 = sphi 0, %s147
      %s148 = sphi 0, %s145
      %s149 = sphi 0, %s148
      %s165 = sphi 0, %s149
      %s173 = sphi 0, %s175
      %s176 = sphi 0, %s173
      %s177 = sphi 0, %s176
      %s193 = sphi 0, %s177
    $region4: #{tcanet_forward.1} parent=1 // loop_header_branch
      %20 = sbr.rel (%p18) target = $region8
    $region5: #{tcanet_forward.1} parent=1 // loop_body
      %s22 = ssub.s32 %s17, 1
      %s23 = ssub.s32 %s17, 2
      %s30 = sadd.s32 1, %s25
      %p31 = scmp.ge.s32.totalorder %s30, 1
      %s32 = scalar_select %p31, 0, %s30
      %s33 = sadd.s32 1, %s24
      %s34 = scalar_select %p31, %s33, %s24
      %p35 = scmp.ge.s32.totalorder %s34, 4
      %s36 = scalar_select %p35, 0, %s34
      %s37 = ssub.s32 %s25, %s32
      %s38 = ssub.s32 %s24, %s36
      %s39 = sor.u32 %s37, %s38
      %p40 = scmp.eq.s32.totalorder %s39, 0
      %s42 = sadd.s32 %s41, 1
      %s43 = scalar_select %p40, %s41, %s42
      %p46 = pneg %p40
      %p47 = scmp.eq.s32.totalorder %s17, 3
      %p48 = por %p46, %p47
      %p49 = scmp.ne.s32.totalorder %s41, %s44
      %p50 = scmp.eq.s32.totalorder %s17, 0
      %p51 = por %p49, %p50
      %p52 = scmp.ne.s32.totalorder %s41, %s44
      %p53 = scmp.eq.s32.totalorder %s22, 3
      %p54 = por %p52, %p53
      %p55 = scmp.ne.s32.totalorder %s44, %s45
      %p56 = scmp.eq.s32.totalorder %s22, 0
      %p57 = por %p55, %p56
      %p58 = scmp.ne.s32.totalorder %s44, %s45
      %p59 = scmp.eq.s32.totalorder %s23, 3
      %p60 = por %p58, %p59
      %p62 = scmp.ne.s32.totalorder %s45, %s61
      %p63 = scmp.eq.s32.totalorder %s23, 0
      %p64 = por %p62, %p63
      %s65 = ssub.s32 %s24, %s36
      %p66 = scmp.eq.s32.totalorder %s65, 0
      %s68 = sadd.s32 %s67, 1
      %s69 = scalar_select %p66, %s67, %s68
      %p72 = pneg %p66
      %p73 = scmp.eq.s32.totalorder %s17, 3
      %p74 = por %p72, %p73
      %p75 = scmp.ne.s32.totalorder %s67, %s70
      %p76 = scmp.eq.s32.totalorder %s17, 0
      %p77 = por %p75, %p76
      %p78 = scmp.ne.s32.totalorder %s67, %s70
      %p79 = scmp.eq.s32.totalorder %s22, 3
      %p80 = por %p78, %p79
      %p81 = scmp.ne.s32.totalorder %s70, %s71
      %p82 = scmp.eq.s32.totalorder %s22, 0
      %p83 = por %p81, %p82
      %p84 = scmp.ne.s32.totalorder %s70, %s71
      %p85 = scmp.eq.s32.totalorder %s23, 3
      %p86 = por %p84, %p85
      %p88 = scmp.ne.s32.totalorder %s71, %s87
      %p89 = scmp.eq.s32.totalorder %s23, 0
      %p90 = por %p88, %p89
      %s91 = ssub.s32 %s24, %s36
      %p92 = scmp.eq.s32.totalorder %s91, 0
      %s94 = sadd.s32 %s93, 1
      %s95 = scalar_select %p92, %s93, %s94
      %p98 = pneg %p92
      %p99 = scmp.eq.s32.totalorder %s17, 3
      %p100 = por %p98, %p99
      %p101 = scmp.ne.s32.totalorder %s93, %s96
      %p102 = scmp.eq.s32.totalorder %s17, 0
      %p103 = por %p101, %p102
      %p104 = scmp.ne.s32.totalorder %s93, %s96
      %p105 = scmp.eq.s32.totalorder %s22, 3
      %p106 = por %p104, %p105
      %p107 = scmp.ne.s32.totalorder %s96, %s97
      %p108 = scmp.eq.s32.totalorder %s22, 0
      %p109 = por %p107, %p108
      %p110 = scmp.ne.s32.totalorder %s96, %s97
      %p111 = scmp.eq.s32.totalorder %s23, 3
      %p112 = por %p110, %p111
      %p114 = scmp.ne.s32.totalorder %s97, %s113
      %p115 = scmp.eq.s32.totalorder %s23, 0
      %p116 = por %p114, %p115
      %s117 = ssub.s32 %s24, %s36
      %p118 = scmp.eq.s32.totalorder %s117, 0
      %s120 = sadd.s32 %s119, 1
      %s121 = scalar_select %p118, %s119, %s120
      %p124 = pneg %p118
      %p125 = scmp.eq.s32.totalorder %s17, 3
      %p126 = por %p124, %p125
      %p127 = scmp.ne.s32.totalorder %s119, %s122
      %p128 = scmp.eq.s32.totalorder %s17, 0
      %p129 = por %p127, %p128
      %p130 = scmp.ne.s32.totalorder %s119, %s122
      %p131 = scmp.eq.s32.totalorder %s22, 3
      %p132 = por %p130, %p131
      %p133 = scmp.ne.s32.totalorder %s122, %s123
      %p134 = scmp.eq.s32.totalorder %s22, 0
      %p135 = por %p133, %p134
      %p136 = scmp.ne.s32.totalorder %s122, %s123
      %p137 = scmp.eq.s32.totalorder %s23, 3
      %p138 = por %p136, %p137
      %p140 = scmp.ne.s32.totalorder %s123, %s139
      %p141 = scmp.eq.s32.totalorder %s23, 0
      %p142 = por %p140, %p141
      %s143 = ssub.s32 %s24, %s36
      %p144 = scmp.eq.s32.totalorder %s143, 0
      %s146 = sadd.s32 %s145, 1
      %s147 = scalar_select %p144, %s145, %s146
      %p150 = pneg %p144
      %p151 = scmp.eq.s32.totalorder %s17, 3
      %p152 = por %p150, %p151
      %p153 = scmp.ne.s32.totalorder %s145, %s148
      %p154 = scmp.eq.s32.totalorder %s17, 0
      %p155 = por %p153, %p154
      %p156 = scmp.ne.s32.totalorder %s145, %s148
      %p157 = scmp.eq.s32.totalorder %s22, 3
      %p158 = por %p156, %p157
      %p159 = scmp.ne.s32.totalorder %s148, %s149
      %p160 = scmp.eq.s32.totalorder %s22, 0
      %p161 = por %p159, %p160
      %p162 = scmp.ne.s32.totalorder %s148, %s149
      %p163 = scmp.eq.s32.totalorder %s23, 3
      %p164 = por %p162, %p163
      %p166 = scmp.ne.s32.totalorder %s149, %s165
      %p167 = scmp.eq.s32.totalorder %s23, 0
      %p168 = por %p166, %p167
      %s169 = ssub.s32 %s25, %s32
      %s170 = ssub.s32 %s24, %s36
      %s171 = sor.u32 %s169, %s170
      %p172 = scmp.eq.s32.totalorder %s171, 0
      %s174 = sadd.s32 %s173, 1
      %s175 = scalar_select %p172, %s173, %s174
      %p178 = pneg %p172
      %p179 = scmp.eq.s32.totalorder %s17, 3
      %p180 = por %p178, %p179
      %p181 = scmp.ne.s32.totalorder %s173, %s176
      %p182 = scmp.eq.s32.totalorder %s17, 0
      %p183 = por %p181, %p182
      %p184 = scmp.ne.s32.totalorder %s173, %s176
      %p185 = scmp.eq.s32.totalorder %s22, 3
      %p186 = por %p184, %p185
      %p187 = scmp.ne.s32.totalorder %s176, %s177
      %p188 = scmp.eq.s32.totalorder %s22, 0
      %p189 = por %p187, %p188
      %p190 = scmp.ne.s32.totalorder %s176, %s177
      %p191 = scmp.eq.s32.totalorder %s23, 3
      %p192 = por %p190, %p191
      %p194 = scmp.ne.s32.totalorder %s177, %s193
      %p195 = scmp.eq.s32.totalorder %s23, 0
      %p196 = por %p194, %p195
      %p197 = scmp.le.s32.totalorder 1, %s17
      %p198 = scmp.lt.s32.totalorder %s17, 5
      %p199 = pnand %p197, %p198
      %p200 = pneg %p199
      // Predicated region
      $region9: #{tcanet_forward.1} parent=5 // pred_check
        _
      $region10: #{tcanet_forward.1} parent=5 // pred_check_branch
        %202 = sbr.rel (%p199) target = $region12
      $region11: #{tcanet_forward.1} parent=5 // pred_region
        %s203 = ssub.s32 %s17, 1
      $region12: #{tcanet_forward.1} parent=5 // pred_fallthru
        _
      %p204 = scmp.lt.s32.totalorder %s17, 4
      // Predicated region
      $region13: #{tcanet_forward.1} parent=5 // pred_check
        %p205 = pneg %p204
      $region14: #{tcanet_forward.1} parent=5 // pred_check_branch
        %207 = sbr.rel (%p205) target = $region16
      $region15: #{tcanet_forward.1} parent=5 // pred_region
        // Predicated region
        $region17: #{tcanet_forward.1} parent=15 // pred_check
          %p208 = pneg %p51
        $region18: #{tcanet_forward.1} parent=15 // pred_check_branch
          %210 = sbr.rel (%p208) target = $region20
        $region19: #{tcanet_forward.1} parent=15 // pred_region
          %s211 = sand.u32 %s41, 1
          %s212 = sand.u32 %s41, 1
          %s213 = smul.addr %s212, 32
          %s214 = scalar_lea.vmem [#allocation2], %s213
          %s215 = smul.u32 2, %s25
          %s216 = smul.addr %s24, 2
          %s217 = smul.addr %s215, 8
          %s218 = sadd.s32 %s216, %s217
          %s219 = smul.addr %s218, 8
          %s220 = scalar_lea.vmem %s0, %s219
          // Predicated region
          $region21: #{tcanet_forward.1} parent=19 // pred_check
            _
          $region22: #{tcanet_forward.1} parent=19 // pred_check_branch
            %222 = sbr.rel (0) target = $region24
          $region23: #{tcanet_forward.1} parent=19 // pred_region
            // Predicated region
            $region25: #{tcanet_forward.1} parent=23 // pred_check
              _
            $region26: #{tcanet_forward.1} parent=23 // pred_check_branch
              %224 = sbr.rel (0) target = $region28
            $region27: #{tcanet_forward.1} parent=23 // pred_region
              // Predicated region
              $region40: #{tcanet_forward.1} parent=27 // pred_check
                _
              $region41: #{tcanet_forward.1} parent=27 // pred_check_branch
                %245 = sbr.rel (0) target = $region43
              $region42: #{tcanet_forward.1} parent=27 // pred_region
                loop: start=0, step=1, limit=1
                $region44: #{tcanet_forward.1} parent=42 // loop_pre_header
                  _
                $region45: #{tcanet_forward.1} parent=42 // loop_header
                  %s247 = sphi 0, %s251
                  %p248 = scmp.ge.s32.totalorder %s247, 1
                  %s252 = sphi %s220, %s220
                  %s253 = sphi %s214, %s214
                $region46: #{tcanet_forward.1} parent=42 // loop_header_branch
                  %250 = sbr.rel (%p248) target = $region50
                $region47: #{tcanet_forward.1} parent=42 // loop_body
                  %v254 = vld [vmem:[%s252] sm:$0xff]
                  %255 = vst [vmem:[%s253] sm:$0xff] %v254
                  %v256 = vld [vmem:[%s252 + $0x8] sm:$0xff]
                  %257 = vst [vmem:[%s253 + $0x8] sm:$0xff] %v256
                  %v258 = vld [vmem:[%s252 + $0x40] sm:$0xff]
                  %259 = vst [vmem:[%s253 + $0x10] sm:$0xff] %v258
                  %v260 = vld [vmem:[%s252 + $0x48] sm:$0xff]
                  %261 = vst [vmem:[%s253 + $0x18] sm:$0xff] %v260
                $region48: #{tcanet_forward.1} parent=42 // loop_footer
                  %s251 = sadd.s32 1, %s247
                $region49: #{tcanet_forward.1} parent=42 // loop_footer_branch
                  %246 = sbr.rel target = $region45
                $region50: #{tcanet_forward.1} parent=42 // loop_exit
                  _
              $region43: #{tcanet_forward.1} parent=27 // pred_fallthru
                _
              // Predicated region
              $region51: #{tcanet_forward.1} parent=27 // pred_check
                _
              $region52: #{tcanet_forward.1} parent=27 // pred_check_branch
                %263 = sbr.rel target = $region54
              $region53: #{tcanet_forward.1} parent=27 // pred_region
                _
              $region54: #{tcanet_forward.1} parent=27 // pred_fallthru
                _
            $region28: #{tcanet_forward.1} parent=23 // pred_fallthru
              _
            // Predicated region
            $region29: #{tcanet_forward.1} parent=23 // pred_check
              _
            $region30: #{tcanet_forward.1} parent=23 // pred_check_branch
              %226 = sbr.rel target = $region32
            $region31: #{tcanet_forward.1} parent=23 // pred_region
              loop: start=0, step=1, limit=1
              $region33: #{tcanet_forward.1} parent=31 // loop_pre_header
                _
              $region34: #{tcanet_forward.1} parent=31 // loop_header
                %s229 = sphi 0, %s233
                %p230 = scmp.ge.s32.totalorder %s229, 1
                %s234 = sphi %s220, %s220
                %s235 = sphi %s214, %s214
              $region35: #{tcanet_forward.1} parent=31 // loop_header_branch
                %232 = sbr.rel (%p230) target = $region39
              $region36: #{tcanet_forward.1} parent=31 // loop_body
                %v236 = vld [vmem:[%s234] sm:$0xff]
                %237 = vst [vmem:[%s235] sm:$0xff] %v236
                %v238 = vld [vmem:[%s234 + $0x8] sm:$0xff]
                %239 = vst [vmem:[%s235 + $0x8] sm:$0xff] %v238
                %v240 = vld [vmem:[%s234 + $0x40] sm:$0xff]
                %241 = vst [vmem:[%s235 + $0x10] sm:$0xff] %v240
                %v242 = vld [vmem:[%s234 + $0x48] sm:$0xff]
                %243 = vst [vmem:[%s235 + $0x18] sm:$0xff] %v242
              $region37: #{tcanet_forward.1} parent=31 // loop_footer
                %s233 = sadd.s32 1, %s229
              $region38: #{tcanet_forward.1} parent=31 // loop_footer_branch
                %228 = sbr.rel target = $region34
              $region39: #{tcanet_forward.1} parent=31 // loop_exit
                _
            $region32: #{tcanet_forward.1} parent=23 // pred_fallthru
              _
          $region24: #{tcanet_forward.1} parent=19 // pred_fallthru
            _
          %264 = vnop
        $region20: #{tcanet_forward.1} parent=15 // pred_fallthru
          _
        // Predicated region
        $region55: #{tcanet_forward.1} parent=15 // pred_check
          %p265 = pneg %p77
        $region56: #{tcanet_forward.1} parent=15 // pred_check_branch
          %267 = sbr.rel (%p265) target = $region58
        $region57: #{tcanet_forward.1} parent=15 // pred_region
          %p268 = scmp.lt.s32.totalorder %s24, 3
          %s269 = scalar_select %p268, %s24, 3
          %s270 = smul.addr %s269, 3
          %s271 = smul.addr %s270, 2
          %s272 = scalar_lea.vmem %s1, %s271
        $region58: #{tcanet_forward.1} parent=15 // pred_fallthru
          _
        // Predicated region
        $region59: #{tcanet_forward.1} parent=15 // pred_check
          %p273 = pneg %p103
        $region60: #{tcanet_forward.1} parent=15 // pred_check_branch
          %275 = sbr.rel (%p273) target = $region62
        $region61: #{tcanet_forward.1} parent=15 // pred_region
          %p276 = scmp.lt.s32.totalorder %s24, 3
          %s277 = scalar_select %p276, %s24, 3
          %s278 = scalar_lea.vmem %s2, %s277
        $region62: #{tcanet_forward.1} parent=15 // pred_fallthru
          _
        // Predicated region
        $region63: #{tcanet_forward.1} parent=15 // pred_check
          %p279 = pneg %p129
        $region64: #{tcanet_forward.1} parent=15 // pred_check_branch
          %281 = sbr.rel (%p279) target = $region66
        $region65: #{tcanet_forward.1} parent=15 // pred_region
          %s282 = sand.u32 %s119, 1
          %s283 = scalar_lea.sflag [#allocation4], %s282
          %s284 = sand.u32 %s119, 1
          %s285 = smul.addr %s284, 192
          %s286 = scalar_lea.vmem [#allocation3], %s285
          %s288 = ssub.s32 3072, 3072
          %289 = vsyncadd %s283, %s288
          %s290 = smul.addr %s24, 48
          %s291 = smul.addr %s290, 64
          %s292 = scalar_lea.hbm %s3, %s291
          %s293 = sshll.u32 %s286, 4
          %s294 = int_to_ptr.vmem [resolvable:$true] %s293
          %299 = dma.hbm_to_vmem [thread:$0]  %s292, 3072, %s294, %s283, 64, 64, 4
        $region66: #{tcanet_forward.1} parent=15 // pred_fallthru
          _
        // Predicated region
        $region67: #{tcanet_forward.1} parent=15 // pred_check
          %p300 = pneg %p155
        $region68: #{tcanet_forward.1} parent=15 // pred_check_branch
          %302 = sbr.rel (%p300) target = $region70
        $region69: #{tcanet_forward.1} parent=15 // pred_region
          %p303 = scmp.lt.s32.totalorder %s24, 3
          %s304 = scalar_select %p303, %s24, 3
          %s305 = scalar_lea.vmem %s4, %s304
        $region70: #{tcanet_forward.1} parent=15 // pred_fallthru
          _
      $region16: #{tcanet_forward.1} parent=5 // pred_fallthru
        _
      %p306 = scmp.le.s32.totalorder 1, %s17
      %p307 = scmp.lt.s32.totalorder %s17, 5
      %p308 = pnand %p306, %p307
      %p309 = pneg %p308
      // Predicated region
      $region71: #{tcanet_forward.1} parent=5 // pred_check
        _
      $region72: #{tcanet_forward.1} parent=5 // pred_check_branch
        %311 = sbr.rel (%p308) target = $region74
      $region73: #{tcanet_forward.1} parent=5 // pred_region
        %s312 = ssub.s32 %s17, 1
        %s313 = sand.u32 %s44, 1
        %s314 = sand.u32 %s44, 1
        %s315 = smul.addr %s314, 32
        %s316 = scalar_lea.vmem [#allocation2], %s315
        // Predicated region
        $region75: #{tcanet_forward.1} parent=73 // pred_check
          %p317 = pneg %p57
        $region76: #{tcanet_forward.1} parent=73 // pred_check_branch
          %319 = sbr.rel (%p317) target = $region78
        $region77: #{tcanet_forward.1} parent=73 // pred_region
          _
        $region78: #{tcanet_forward.1} parent=73 // pred_fallthru
          _
        %s320 = sand.u32 %s122, 1
        %s321 = scalar_lea.sflag [#allocation4], %s320
        %s322 = sand.u32 %s122, 1
        %s323 = smul.addr %s322, 192
        %s324 = scalar_lea.vmem [#allocation3], %s323
        // Predicated region
        $region79: #{tcanet_forward.1} parent=73 // pred_check
          %p325 = pneg %p135
        $region80: #{tcanet_forward.1} parent=73 // pred_check_branch
          %327 = sbr.rel (%p325) target = $region82
        $region81: #{tcanet_forward.1} parent=73 // pred_region
          %328 = dma.done %s321, 3072
        $region82: #{tcanet_forward.1} parent=73 // pred_fallthru
          _
        %s329 = sand.u32 %s44, 1
        %s330 = sand.u32 %s44, 1
        %s331 = smul.addr %s330, 32
        %s332 = scalar_lea.vmem [#allocation2], %s331
        %p333 = pneg %p57
        %p334 = pneg %p54
        %p335 = scmp.lt.s32.totalorder %s26, 3
        %s336 = scalar_select %p335, %s26, 3
        %s337 = smul.addr %s336, 3
        %s338 = smul.addr %s337, 2
        %s339 = scalar_lea.vmem %s1, %s338
        %p340 = pneg %p83
        %p341 = pneg %p80
        %p342 = scmp.lt.s32.totalorder %s26, 3
        %s343 = scalar_select %p342, %s26, 3
        %s344 = scalar_lea.vmem %s2, %s343
        %p345 = pneg %p109
        %p346 = pneg %p106
        %s347 = sand.u32 %s122, 1
        %s348 = scalar_lea.sflag [#allocation4], %s347
        %s349 = sand.u32 %s122, 1
        %s350 = smul.addr %s349, 192
        %s351 = scalar_lea.vmem [#allocation3], %s350
        %p352 = pneg %p135
        %p353 = pneg %p132
        %p354 = scmp.lt.s32.totalorder %s26, 3
        %s355 = scalar_select %p354, %s26, 3
        %s356 = scalar_lea.vmem %s4, %s355
        %p357 = pneg %p161
        %p358 = pneg %p158
        %p359 = pneg %p189
        %p360 = pneg %p186
        %s361 = sand.u32 %s176, 1
        %s362 = scalar_lea.sflag [#allocation5], %s361
        %s363 = sand.u32 %s176, 1
        %s364 = smul.addr %s363, 32
        %s365 = scalar_lea.vmem [#allocation6], %s364
        %s366 = smul.u32 2, %s27
        %p367 = scmp.lt.s32.totalorder %s26, 3
        %s368 = scalar_select %p367, %s26, 3
        %s369 = smul.addr %s368, 3
        %s370 = smul.addr %s369, 2
        %s371 = scalar_lea.vmem %s1, %s370
        %p372 = scmp.lt.s32.totalorder %s26, 3
        %s373 = scalar_select %p372, %s26, 3
        %s374 = scalar_lea.vmem %s2, %s373
        %p375 = scmp.lt.s32.totalorder %s26, 3
        %s376 = scalar_select %p375, %s26, 3
        %s377 = scalar_lea.vmem %s4, %s376
        %s378 = smul.u32 2, %s27
        %v380 = vld [vmem:[%s316] sm:$0xff]
        %v381 = vld [vmem:[%s316 + $0x8] sm:$0xff]
        %v382 = vld [vmem:[%s316 + $0x10] sm:$0xff]
        %v383 = vld [vmem:[%s316 + $0x18] sm:$0xff]
        %v384 = vlaneseq
        %v385 = vshrl.u32 %v384, 7
        %v386 = vadd.s32 %v385, 8
        %vm387 = vcmp.eq.s32.totalorder %v385, 0
        %vm388 = vcmp.eq.s32.totalorder %v386, 0
        %v389 = vrot.slane %v380, 7
        %v390 = vrot.slane %v381, 7
        %v391 = vrot.slane %v382, 7
        %v392 = vrot.slane %v383, 7
        %vm393 = vcmp.lt.s32.totalorder %v385, 1
        %v394 = vsel %vm393, %v391, %v392
        %v395 = vsel %vm393, %v390, %v391
        %v396 = vsel %vm393, %v389, %v390
        %v397 = vsel %vm393, %v392, %v389
        %v398 = vsel %vm387, 0.0, %v397
        %v399 = vsel %vm388, 0.0, %v396
        %v400 = vsel %vm387, 0.0, %v395
        %v401 = vsel %vm388, 0.0, %v394
        %vm402 = vcmp.eq.s32.totalorder %v385, 15
        %vm403 = vcmp.eq.s32.totalorder %v386, 15
        %v404 = vrot.slane %v380, 1
        %v405 = vrot.slane %v381, 1
        %v406 = vrot.slane %v382, 1
        %v407 = vrot.slane %v383, 1
        %vm408 = vcmp.lt.s32.totalorder %v385, 7
        %v409 = vsel %vm408, %v406, %v407
        %v410 = vsel %vm408, %v405, %v406
        %v411 = vsel %vm408, %v404, %v405
        %v412 = vsel %vm408, %v407, %v404
        %v413 = vsel %vm402, 0.0, %v411
        %v414 = vsel %vm403, 0.0, %v410
        %v415 = vsel %vm402, 0.0, %v409
        %v416 = vsel %vm403, 0.0, %v412
        %v417 = vpack.c.bf16 %v399, %v398
        %v418 = vpack.c.bf16 %v401, %v400
        %v419 = vld [vmem:[%s371] sm:$0x3]
        %v420 = vpack.c.bf16 %v381, %v380
        %v421 = vpack.c.bf16 %v383, %v382
        %s422 = scalar_lea.vmem %s371, 2
        %v423 = vld [vmem:[%s422] sm:$0x3]
        %vm424 = vcmask 31744
        %v426 = vsel %vm424, %v420, 0
        %v429 = vsel %vm424, %v421, 0
        %vm431 = vcmask 1041408
        %v433 = vsel %vm431, %v423, 0
        %435 = vmatprep.subr.bf16.mxu0 0
        %436 = vmatpush1.bf16.msra.mxu0 %v433
        %437 = vmatprep.subr.bf16.mxu0 0
        %438 = vmatpush1.bf16.msra.mxu0 0
        %439 = vmatprep.subr.bf16.mxu0 0
        %440 = vmatpush1.bf16.msra.mxu0 0
        %441 = vmatprep.subr.bf16.mxu0 0
        %442 = vmatpush1.bf16.msra.mxu0 0
        %443 = vmatprep.subr.bf16.mxu0 0
        %444 = vmatpush1.bf16.msra.mxu0 0
        %445 = vmatprep.subr.bf16.mxu0 0
        %446 = vmatpush1.bf16.msra.mxu0 0
        %447 = vmatprep.subr.bf16.mxu0 0
        %448 = vmatpush1.bf16.msra.mxu0 0
        %449 = vmatprep.subr.bf16.mxu0 0
        %450 = vmatpush1.bf16.msra.mxu0 0
        %451 = vmatprep.subr.bf16.mxu0 0
        %452 = vmatpush1.bf16.msra.mxu0 0
        %453 = vmatprep.subr.bf16.mxu0 0
        %454 = vmatpush1.bf16.msra.mxu0 0
        %455 = vmatprep.subr.bf16.mxu0 0
        %456 = vmatpush1.bf16.msra.mxu0 0
        %457 = vmatprep.subr.bf16.mxu0 0
        %458 = vmatpush1.bf16.msra.mxu0 0
        %459 = vmatprep.subr.bf16.mxu0 0
        %460 = vmatpush1.bf16.msra.mxu0 0
        %461 = vmatprep.subr.bf16.mxu0 0
        %462 = vmatpush1.bf16.msra.mxu0 0
        %463 = vmatprep.subr.bf16.mxu0 0
        %464 = vmatpush1.bf16.msra.mxu0 0
        %465 = vmatprep.subr.bf16.mxu0 0
        %466 = vmatpush1.bf16.msra.mxu0 0
        %467 = vmatprep.mubr.bf16.mxu0 0
        %468 = vmatmul.mubr.bf16.gmra.mrb[0].mxu0 %v426
        %v469 = vpop.f32.mrb[0].mxu0
        %v470 = vadd.f32 0.0, %v469
        %v471 = vpop.f32.mrb[0].mxu0
        %v472 = vpop.f32.mrb[0].mxu0
        %v473 = vadd.f32 0.0, %v472
        %v474 = vpop.f32.mrb[0].mxu0
        %475 = vmatprep.mubr.bf16.mxu0 0
        %476 = vmatmul.mubr.bf16.gmra.mrb[0].mxu0 %v429
        %v477 = vpop.f32.mrb[0].mxu0
        %v478 = vadd.f32 0.0, %v477
        %v479 = vpop.f32.mrb[0].mxu0
        %v480 = vpop.f32.mrb[0].mxu0
        %v481 = vadd.f32 0.0, %v480
        %v482 = vpop.f32.mrb[0].mxu0
        %483 = vdwg.mxu0
        %v485 = vsel %vm424, %v417, 0
        %v488 = vsel %vm424, %v418, 0
        %v491 = vsel %vm431, %v419, 0
        %493 = vmatprep.subr.bf16.mxu0 0
        %494 = vmatpush1.bf16.msra.mxu0 %v491
        %495 = vmatprep.subr.bf16.mxu0 0
        %496 = vmatpush1.bf16.msra.mxu0 0
        %497 = vmatprep.subr.bf16.mxu0 0
        %498 = vmatpush1.bf16.msra.mxu0 0
        %499 = vmatprep.subr.bf16.mxu0 0
        %500 = vmatpush1.bf16.msra.mxu0 0
        %501 = vmatprep.subr.bf16.mxu0 0
        %502 = vmatpush1.bf16.msra.mxu0 0
        %503 = vmatprep.subr.bf16.mxu0 0
        %504 = vmatpush1.bf16.msra.mxu0 0
        %505 = vmatprep.subr.bf16.mxu0 0
        %506 = vmatpush1.bf16.msra.mxu0 0
        %507 = vmatprep.subr.bf16.mxu0 0
        %508 = vmatpush1.bf16.msra.mxu0 0
        %509 = vmatprep.subr.bf16.mxu0 0
        %510 = vmatpush1.bf16.msra.mxu0 0
        %511 = vmatprep.subr.bf16.mxu0 0
        %512 = vmatpush1.bf16.msra.mxu0 0
        %513 = vmatprep.subr.bf16.mxu0 0
        %514 = vmatpush1.bf16.msra.mxu0 0
        %515 = vmatprep.subr.bf16.mxu0 0
        %516 = vmatpush1.bf16.msra.mxu0 0
        %517 = vmatprep.subr.bf16.mxu0 0
        %518 = vmatpush1.bf16.msra.mxu0 0
        %519 = vmatprep.subr.bf16.mxu0 0
        %520 = vmatpush1.bf16.msra.mxu0 0
        %521 = vmatprep.subr.bf16.mxu0 0
        %522 = vmatpush1.bf16.msra.mxu0 0
        %523 = vmatprep.subr.bf16.mxu0 0
        %524 = vmatpush1.bf16.msra.mxu0 0
        %525 = vmatprep.mubr.bf16.mxu0 0
        %526 = vmatmul.mubr.bf16.gmra.mrb[0].mxu0 %v485
        %v527 = vpop.f32.mrb[0].mxu0
        %v528 = vadd.f32 %v470, %v527
        %v529 = vpop.f32.mrb[0].mxu0
        %v530 = vpop.f32.mrb[0].mxu0
        %v531 = vadd.f32 %v473, %v530
        %v532 = vpop.f32.mrb[0].mxu0
        %533 = vmatprep.mubr.bf16.mxu0 0
        %534 = vmatmul.mubr.bf16.gmra.mrb[0].mxu0 %v488
        %v535 = vpop.f32.mrb[0].mxu0
        %v536 = vadd.f32 %v478, %v535
        %v537 = vpop.f32.mrb[0].mxu0
        %v538 = vpop.f32.mrb[0].mxu0
        %v539 = vadd.f32 %v481, %v538
        %v540 = vpop.f32.mrb[0].mxu0
        %541 = vdwg.mxu0
        %v542 = vpack.c.bf16 %v414, %v413
        %v543 = vpack.c.bf16 %v416, %v415
        %s544 = scalar_lea.vmem %s371, 4
        %v545 = vld [vmem:[%s544] sm:$0x3]
        %v547 = vsel %vm424, %v542, 0
        %v550 = vsel %vm424, %v543, 0
        %v553 = vsel %vm431, %v545, 0
        %555 = vmatprep.subr.bf16.mxu0 0
        %556 = vmatpush1.bf16.msra.mxu0 %v553
        %557 = vmatprep.subr.bf16.mxu0 0
        %558 = vmatpush1.bf16.msra.mxu0 0
        %559 = vmatprep.subr.bf16.mxu0 0
        %560 = vmatpush1.bf16.msra.mxu0 0
        %561 = vmatprep.subr.bf16.mxu0 0
        %562 = vmatpush1.bf16.msra.mxu0 0
        %563 = vmatprep.subr.bf16.mxu0 0
        %564 = vmatpush1.bf16.msra.mxu0 0
        %565 = vmatprep.subr.bf16.mxu0 0
        %566 = vmatpush1.bf16.msra.mxu0 0
        %567 = vmatprep.subr.bf16.mxu0 0
        %568 = vmatpush1.bf16.msra.mxu0 0
        %569 = vmatprep.subr.bf16.mxu0 0
        %570 = vmatpush1.bf16.msra.mxu0 0
        %571 = vmatprep.subr.bf16.mxu0 0
        %572 = vmatpush1.bf16.msra.mxu0 0
        %573 = vmatprep.subr.bf16.mxu0 0
        %574 = vmatpush1.bf16.msra.mxu0 0
        %575 = vmatprep.subr.bf16.mxu0 0
        %576 = vmatpush1.bf16.msra.mxu0 0
        %577 = vmatprep.subr.bf16.mxu0 0
        %578 = vmatpush1.bf16.msra.mxu0 0
        %579 = vmatprep.subr.bf16.mxu0 0
        %580 = vmatpush1.bf16.msra.mxu0 0
        %581 = vmatprep.subr.bf16.mxu0 0
        %582 = vmatpush1.bf16.msra.mxu0 0
        %583 = vmatprep.subr.bf16.mxu0 0
        %584 = vmatpush1.bf16.msra.mxu0 0
        %585 = vmatprep.subr.bf16.mxu0 0
        %586 = vmatpush1.bf16.msra.mxu0 0
        %587 = vmatprep.mubr.bf16.mxu0 0
        %588 = vmatmul.mubr.bf16.gmra.mrb[0].mxu0 %v547
        %v589 = vpop.f32.mrb[0].mxu0
        %v590 = vadd.f32 0.0, %v589
        %v591 = vpop.f32.mrb[0].mxu0
        %v592 = vpop.f32.mrb[0].mxu0
        %v593 = vadd.f32 0.0, %v592
        %v594 = vpop.f32.mrb[0].mxu0
        %595 = vmatprep.mubr.bf16.mxu0 0
        %596 = vmatmul.mubr.bf16.gmra.mrb[0].mxu0 %v550
        %v597 = vpop.f32.mrb[0].mxu0
        %v598 = vadd.f32 0.0, %v597
        %v599 = vpop.f32.mrb[0].mxu0
        %v600 = vpop.f32.mrb[0].mxu0
        %v601 = vadd.f32 0.0, %v600
        %v602 = vpop.f32.mrb[0].mxu0
        %603 = vdwg.mxu0
        %v604 = vadd.f32 %v528, %v590
        %v605 = vadd.f32 %v531, %v593
        %v606 = vadd.f32 %v536, %v598
        %v607 = vadd.f32 %v539, %v601
        %v608 = vld [vmem:[%s374] sm:$0x1]
        %v610 = vlaneseq
        %v611 = vshrl.u32 %v610, 7
        %v612 = vsub.s32 0, %v611
        %v613 = vrot.slane %v608, %v612
        %v615 = vadd.f32 %v604, %v613
        %v616 = vadd.f32 %v605, %v613
        %v617 = vadd.f32 %v606, %v613
        %v618 = vadd.f32 %v607, %v613
        %v619 = vmax.f32 %v615, 0.0
        %v620 = vmax.f32 %v616, 0.0
        %v621 = vmax.f32 %v617, 0.0
        %v622 = vmax.f32 %v618, 0.0
        %v623 = vrot.slane %v619, 7
        %v624 = vrot.slane %v620, 7
        %v625 = vrot.slane %v621, 7
        %v626 = vrot.slane %v622, 7
        %v627 = vsel %vm393, %v625, %v626
        %v628 = vsel %vm393, %v624, %v625
        %v629 = vsel %vm393, %v623, %v624
        %v630 = vsel %vm393, %v626, %v623
        %v631 = vsel %vm387, 0.0, %v630
        %v632 = vsel %vm388, 0.0, %v629
        %v633 = vsel %vm387, 0.0, %v628
        %v634 = vsel %vm388, 0.0, %v627
        %v635 = vrot.slane %v619, 1
        %v636 = vrot.slane %v620, 1
        %v637 = vrot.slane %v621, 1
        %v638 = vrot.slane %v622, 1
        %v639 = vsel %vm408, %v637, %v638
        %v640 = vsel %vm408, %v636, %v637
        %v641 = vsel %vm408, %v635, %v636
        %v642 = vsel %vm408, %v638, %v635
        %v643 = vsel %vm402, 0.0, %v641
        %v644 = vsel %vm403, 0.0, %v640
        %v645 = vsel %vm402, 0.0, %v639
        %v646 = vsel %vm403, 0.0, %v642
        %v647 = vpack.c.bf16 %v632, %v631
        %v648 = vpack.c.bf16 %v634, %v633
        %v649 = vld [vmem:[%s324] sm:$0xf]
        %v650 = vld [vmem:[%s324 + $0x4] sm:$0xf]
        %v651 = vld [vmem:[%s324 + $0x8] sm:$0xf]
        %v652 = vld [vmem:[%s324 + $0xc] sm:$0xf]
        %v653 = vld [vmem:[%s324 + $0x10] sm:$0xf]
        %v654 = vld [vmem:[%s324 + $0x14] sm:$0xf]
        %v655 = vld [vmem:[%s324 + $0x18] sm:$0xf]
        %v656 = vld [vmem:[%s324 + $0x1c] sm:$0xf]
        %v657 = vld [vmem:[%s324 + $0x20] sm:$0xf]
        %v658 = vld [vmem:[%s324 + $0x24] sm:$0xf]
        %v659 = vld [vmem:[%s324 + $0x28] sm:$0xf]
        %v660 = vld [vmem:[%s324 + $0x2c] sm:$0xf]
        %v661 = vld [vmem:[%s324 + $0x30] sm:$0xf]
        %v662 = vld [vmem:[%s324 + $0x34] sm:$0xf]
        %v663 = vld [vmem:[%s324 + $0x38] sm:$0xf]
        %v664 = vld [vmem:[%s324 + $0x3c] sm:$0xf]
        %v665 = vpack.c.bf16 %v620, %v619
        %v666 = vpack.c.bf16 %v622, %v621
        %s667 = scalar_lea.vmem %s324, 64 [#allocation3]
        %v668 = vld [vmem:[%s667] sm:$0xf]
        %v669 = vld [vmem:[%s667 + $0x4] sm:$0xf]
        %v670 = vld [vmem:[%s667 + $0x8] sm:$0xf]
        %v671 = vld [vmem:[%s667 + $0xc] sm:$0xf]
        %v672 = vld [vmem:[%s667 + $0x10] sm:$0xf]
        %v673 = vld [vmem:[%s667 + $0x14] sm:$0xf]
        %v674 = vld [vmem:[%s667 + $0x18] sm:$0xf]
        %v675 = vld [vmem:[%s667 + $0x1c] sm:$0xf]
        %v676 = vld [vmem:[%s667 + $0x20] sm:$0xf]
        %v677 = vld [vmem:[%s667 + $0x24] sm:$0xf]
        %v678 = vld [vmem:[%s667 + $0x28] sm:$0xf]
        %v679 = vld [vmem:[%s667 + $0x2c] sm:$0xf]
        %v680 = vld [vmem:[%s667 + $0x30] sm:$0xf]
        %v681 = vld [vmem:[%s667 + $0x34] sm:$0xf]
        %v682 = vld [vmem:[%s667 + $0x38] sm:$0xf]
        %v683 = vld [vmem:[%s667 + $0x3c] sm:$0xf]
        %v700 = vunpack.c.l.b16 %v668
        %v701 = vunpack.c.l.b16 %v669
        %v702 = vunpack.c.l.b16 %v670
        %v703 = vunpack.c.l.b16 %v671
        %v704 = vunpack.c.l.b16 %v672
        %v705 = vunpack.c.l.b16 %v673
        %v706 = vunpack.c.l.b16 %v674
        %v707 = vunpack.c.l.b16 %v675
        %v708 = vunpack.c.l.b16 %v676
        %v709 = vunpack.c.l.b16 %v677
        %v710 = vunpack.c.l.b16 %v678
        %v711 = vunpack.c.l.b16 %v679
        %v712 = vunpack.c.l.b16 %v680
        %v713 = vunpack.c.l.b16 %v681
        %v714 = vunpack.c.l.b16 %v682
        %v715 = vunpack.c.l.b16 %v683
        %v716 = vpack.c.b16 %v701, %v700
        %v717 = vpack.c.b16 %v703, %v702
        %v718 = vpack.c.b16 %v705, %v704
        %v719 = vpack.c.b16 %v707, %v706
        %v720 = vpack.c.b16 %v709, %v708
        %v721 = vpack.c.b16 %v711, %v710
        %v722 = vpack.c.b16 %v713, %v712
        %v723 = vpack.c.b16 %v715, %v714
        %732 = vmatprep.subr.bf16.mxu0 0
        %733 = vmatpush1.bf16.msra.mxu0 %v716
        %734 = vmatprep.subr.bf16.mxu0 0
        %735 = vmatpush1.bf16.msra.mxu0 %v717
        %736 = vmatprep.subr.bf16.mxu0 0
        %737 = vmatpush1.bf16.msra.mxu0 %v718
        %738 = vmatprep.subr.bf16.mxu0 0
        %739 = vmatpush1.bf16.msra.mxu0 %v719
        %740 = vmatprep.subr.bf16.mxu0 0
        %741 = vmatpush1.bf16.msra.mxu0 %v720
        %742 = vmatprep.subr.bf16.mxu0 0
        %743 = vmatpush1.bf16.msra.mxu0 %v721
        %744 = vmatprep.subr.bf16.mxu0 0
        %745 = vmatpush1.bf16.msra.mxu0 %v722
        %746 = vmatprep.subr.bf16.mxu0 0
        %747 = vmatpush1.bf16.msra.mxu0 %v723
        %748 = vmatprep.subr.bf16.mxu0 0
        %749 = vmatpush1.bf16.msra.mxu0 0
        %750 = vmatprep.subr.bf16.mxu0 0
        %751 = vmatpush1.bf16.msra.mxu0 0
        %752 = vmatprep.subr.bf16.mxu0 0
        %753 = vmatpush1.bf16.msra.mxu0 0
        %754 = vmatprep.subr.bf16.mxu0 0
        %755 = vmatpush1.bf16.msra.mxu0 0
        %756 = vmatprep.subr.bf16.mxu0 0
        %757 = vmatpush1.bf16.msra.mxu0 0
        %758 = vmatprep.subr.bf16.mxu0 0
        %759 = vmatpush1.bf16.msra.mxu0 0
        %760 = vmatprep.subr.bf16.mxu0 0
        %761 = vmatpush1.bf16.msra.mxu0 0
        %762 = vmatprep.subr.bf16.mxu0 0
        %763 = vmatpush1.bf16.msra.mxu0 0
        %764 = vmatprep.mubr.bf16.mxu0 0
        %765 = vmatmul.mubr.bf16.gmra.mrb[0].mxu0 %v665
        %v766 = vpop.f32.mrb[0].mxu0
        %v767 = vadd.f32 0.0, %v766
        %v768 = vpop.f32.mrb[0].mxu0
        %v769 = vpop.f32.mrb[0].mxu0
        %v770 = vadd.f32 0.0, %v769
        %v771 = vpop.f32.mrb[0].mxu0
        %772 = vmatprep.mubr.bf16.mxu0 0
        %773 = vmatmul.mubr.bf16.gmra.mrb[0].mxu0 %v666
        %v774 = vpop.f32.mrb[0].mxu0
        %v775 = vadd.f32 0.0, %v774
        %v776 = vpop.f32.mrb[0].mxu0
        %v777 = vpop.f32.mrb[0].mxu0
        %v778 = vadd.f32 0.0, %v777
        %v779 = vpop.f32.mrb[0].mxu0
        %780 = vdwg.mxu0
        %v797 = vunpack.c.l.b16 %v649
        %v798 = vunpack.c.l.b16 %v650
        %v799 = vunpack.c.l.b16 %v651
        %v800 = vunpack.c.l.b16 %v652
        %v801 = vunpack.c.l.b16 %v653
        %v802 = vunpack.c.l.b16 %v654
        %v803 = vunpack.c.l.b16 %v655
        %v804 = vunpack.c.l.b16 %v656
        %v805 = vunpack.c.l.b16 %v657
        %v806 = vunpack.c.l.b16 %v658
        %v807 = vunpack.c.l.b16 %v659
        %v808 = vunpack.c.l.b16 %v660
        %v809 = vunpack.c.l.b16 %v661
        %v810 = vunpack.c.l.b16 %v662
        %v811 = vunpack.c.l.b16 %v663
        %v812 = vunpack.c.l.b16 %v664
        %v813 = vpack.c.b16 %v798, %v797
        %v814 = vpack.c.b16 %v800, %v799
        %v815 = vpack.c.b16 %v802, %v801
        %v816 = vpack.c.b16 %v804, %v803
        %v817 = vpack.c.b16 %v806, %v805
        %v818 = vpack.c.b16 %v808, %v807
        %v819 = vpack.c.b16 %v810, %v809
        %v820 = vpack.c.b16 %v812, %v811
        %829 = vmatprep.subr.bf16.mxu0 0
        %830 = vmatpush1.bf16.msra.mxu0 %v813
        %831 = vmatprep.subr.bf16.mxu0 0
        %832 = vmatpush1.bf16.msra.mxu0 %v814
        %833 = vmatprep.subr.bf16.mxu0 0
        %834 = vmatpush1.bf16.msra.mxu0 %v815
        %835 = vmatprep.subr.bf16.mxu0 0
        %836 = vmatpush1.bf16.msra.mxu0 %v816
        %837 = vmatprep.subr.bf16.mxu0 0
        %838 = vmatpush1.bf16.msra.mxu0 %v817
        %839 = vmatprep.subr.bf16.mxu0 0
        %840 = vmatpush1.bf16.msra.mxu0 %v818
        %841 = vmatprep.subr.bf16.mxu0 0
        %842 = vmatpush1.bf16.msra.mxu0 %v819
        %843 = vmatprep.subr.bf16.mxu0 0
        %844 = vmatpush1.bf16.msra.mxu0 %v820
        %845 = vmatprep.subr.bf16.mxu0 0
        %846 = vmatpush1.bf16.msra.mxu0 0
        %847 = vmatprep.subr.bf16.mxu0 0
        %848 = vmatpush1.bf16.msra.mxu0 0
        %849 = vmatprep.subr.bf16.mxu0 0
        %850 = vmatpush1.bf16.msra.mxu0 0
        %851 = vmatprep.subr.bf16.mxu0 0
        %852 = vmatpush1.bf16.msra.mxu0 0
        %853 = vmatprep.subr.bf16.mxu0 0
        %854 = vmatpush1.bf16.msra.mxu0 0
        %855 = vmatprep.subr.bf16.mxu0 0
        %856 = vmatpush1.bf16.msra.mxu0 0
        %857 = vmatprep.subr.bf16.mxu0 0
        %858 = vmatpush1.bf16.msra.mxu0 0
        %859 = vmatprep.subr.bf16.mxu0 0
        %860 = vmatpush1.bf16.msra.mxu0 0
        %861 = vmatprep.mubr.bf16.mxu0 0
        %862 = vmatmul.mubr.bf16.gmra.mrb[0].mxu0 %v647
        %v863 = vpop.f32.mrb[0].mxu0
        %v864 = vadd.f32 %v767, %v863
        %v865 = vpop.f32.mrb[0].mxu0
        %v866 = vpop.f32.mrb[0].mxu0
        %v867 = vadd.f32 %v770, %v866
        %v868 = vpop.f32.mrb[0].mxu0
        %869 = vmatprep.mubr.bf16.mxu0 0
        %870 = vmatmul.mubr.bf16.gmra.mrb[0].mxu0 %v648
        %v871 = vpop.f32.mrb[0].mxu0
        %v872 = vadd.f32 %v775, %v871
        %v873 = vpop.f32.mrb[0].mxu0
        %v874 = vpop.f32.mrb[0].mxu0
        %v875 = vadd.f32 %v778, %v874
        %v876 = vpop.f32.mrb[0].mxu0
        %877 = vdwg.mxu0
        %v878 = vpack.c.bf16 %v644, %v643
        %v879 = vpack.c.bf16 %v646, %v645
        %s880 = scalar_lea.vmem %s324, 128 [#allocation3]
        %v881 = vld [vmem:[%s880] sm:$0xf]
        %v882 = vld [vmem:[%s880 + $0x4] sm:$0xf]
        %v883 = vld [vmem:[%s880 + $0x8] sm:$0xf]
        %v884 = vld [vmem:[%s880 + $0xc] sm:$0xf]
        %v885 = vld [vmem:[%s880 + $0x10] sm:$0xf]
        %v886 = vld [vmem:[%s880 + $0x14] sm:$0xf]
        %v887 = vld [vmem:[%s880 + $0x18] sm:$0xf]
        %v888 = vld [vmem:[%s880 + $0x1c] sm:$0xf]
        %v889 = vld [vmem:[%s880 + $0x20] sm:$0xf]
        %v890 = vld [vmem:[%s880 + $0x24] sm:$0xf]
        %v891 = vld [vmem:[%s880 + $0x28] sm:$0xf]
        %v892 = vld [vmem:[%s880 + $0x2c] sm:$0xf]
        %v893 = vld [vmem:[%s880 + $0x30] sm:$0xf]
        %v894 = vld [vmem:[%s880 + $0x34] sm:$0xf]
        %v895 = vld [vmem:[%s880 + $0x38] sm:$0xf]
        %v896 = vld [vmem:[%s880 + $0x3c] sm:$0xf]
        %v913 = vunpack.c.l.b16 %v881
        %v914 = vunpack.c.l.b16 %v882
        %v915 = vunpack.c.l.b16 %v883
        %v916 = vunpack.c.l.b16 %v884
        %v917 = vunpack.c.l.b16 %v885
        %v918 = vunpack.c.l.b16 %v886
        %v919 = vunpack.c.l.b16 %v887
        %v920 = vunpack.c.l.b16 %v888
        %v921 = vunpack.c.l.b16 %v889
        %v922 = vunpack.c.l.b16 %v890
        %v923 = vunpack.c.l.b16 %v891
        %v924 = vunpack.c.l.b16 %v892
        %v925 = vunpack.c.l.b16 %v893
        %v926 = vunpack.c.l.b16 %v894
        %v927 = vunpack.c.l.b16 %v895
        %v928 = vunpack.c.l.b16 %v896
        %v929 = vpack.c.b16 %v914, %v913
        %v930 = vpack.c.b16 %v916, %v915
        %v931 = vpack.c.b16 %v918, %v917
        %v932 = vpack.c.b16 %v920, %v919
        %v933 = vpack.c.b16 %v922, %v921
        %v934 = vpack.c.b16 %v924, %v923
        %v935 = vpack.c.b16 %v926, %v925
        %v936 = vpack.c.b16 %v928, %v927
        %945 = vmatprep.subr.bf16.mxu0 0
        %946 = vmatpush1.bf16.msra.mxu0 %v929
        %947 = vmatprep.subr.bf16.mxu0 0
        %948 = vmatpush1.bf16.msra.mxu0 %v930
        %949 = vmatprep.subr.bf16.mxu0 0
        %950 = vmatpush1.bf16.msra.mxu0 %v931
        %951 = vmatprep.subr.bf16.mxu0 0
        %952 = vmatpush1.bf16.msra.mxu0 %v932
        %953 = vmatprep.subr.bf16.mxu0 0
        %954 = vmatpush1.bf16.msra.mxu0 %v933
        %955 = vmatprep.subr.bf16.mxu0 0
        %956 = vmatpush1.bf16.msra.mxu0 %v934
        %957 = vmatprep.subr.bf16.mxu0 0
        %958 = vmatpush1.bf16.msra.mxu0 %v935
        %959 = vmatprep.subr.bf16.mxu0 0
        %960 = vmatpush1.bf16.msra.mxu0 %v936
        %961 = vmatprep.subr.bf16.mxu0 0
        %962 = vmatpush1.bf16.msra.mxu0 0
        %963 = vmatprep.subr.bf16.mxu0 0
        %964 = vmatpush1.bf16.msra.mxu0 0
        %965 = vmatprep.subr.bf16.mxu0 0
        %966 = vmatpush1.bf16.msra.mxu0 0
        %967 = vmatprep.subr.bf16.mxu0 0
        %968 = vmatpush1.bf16.msra.mxu0 0
        %969 = vmatprep.subr.bf16.mxu0 0
        %970 = vmatpush1.bf16.msra.mxu0 0
        %971 = vmatprep.subr.bf16.mxu0 0
        %972 = vmatpush1.bf16.msra.mxu0 0
        %973 = vmatprep.subr.bf16.mxu0 0
        %974 = vmatpush1.bf16.msra.mxu0 0
        %975 = vmatprep.subr.bf16.mxu0 0
        %976 = vmatpush1.bf16.msra.mxu0 0
        %977 = vmatprep.mubr.bf16.mxu0 0
        %978 = vmatmul.mubr.bf16.gmra.mrb[0].mxu0 %v878
        %v979 = vpop.f32.mrb[0].mxu0
        %v980 = vadd.f32 0.0, %v979
        %v981 = vpop.f32.mrb[0].mxu0
        %v982 = vpop.f32.mrb[0].mxu0
        %v983 = vadd.f32 0.0, %v982
        %v984 = vpop.f32.mrb[0].mxu0
        %985 = vmatprep.mubr.bf16.mxu0 0
        %986 = vmatmul.mubr.bf16.gmra.mrb[0].mxu0 %v879
        %v987 = vpop.f32.mrb[0].mxu0
        %v988 = vadd.f32 0.0, %v987
        %v989 = vpop.f32.mrb[0].mxu0
        %v990 = vpop.f32.mrb[0].mxu0
        %v991 = vadd.f32 0.0, %v990
        %v992 = vpop.f32.mrb[0].mxu0
        %993 = vdwg.mxu0
        %v994 = vadd.f32 %v864, %v980
        %v995 = vadd.f32 %v867, %v983
        %v996 = vadd.f32 %v872, %v988
        %v997 = vadd.f32 %v875, %v991
        %v998 = vld [vmem:[%s377] sm:$0x1]
        %v1000 = vlaneseq
        %v1001 = vshrl.u32 %v1000, 7
        %v1002 = vsub.s32 0, %v1001
        %v1003 = vrot.slane %v998, %v1002
        %v1005 = vadd.f32 %v994, %v1003
        %v1006 = vadd.f32 %v995, %v1003
        %v1007 = vadd.f32 %v996, %v1003
        %v1008 = vadd.f32 %v997, %v1003
        %v1009 = vmax.f32 %v1005, 0.0
        %v1010 = vmax.f32 %v1006, 0.0
        %v1011 = vmax.f32 %v1007, 0.0
        %v1012 = vmax.f32 %v1008, 0.0
        %1013 = vst [vmem:[%s365] sm:$0xff] %v1009
        %1014 = vst [vmem:[%s365 + $0x8] sm:$0xff] %v1010
        %1015 = vst [vmem:[%s365 + $0x10] sm:$0xff] %v1011
        %1016 = vst [vmem:[%s365 + $0x18] sm:$0xff] %v1012
        %s1017 = sand.u32 %s176, 1
        %s1018 = scalar_lea.sflag [#allocation5], %s1017
        %s1019 = sand.u32 %s176, 1
        %s1020 = smul.addr %s1019, 32
        %s1021 = scalar_lea.vmem [#allocation6], %s1020
        // Predicated region
        $region83: #{tcanet_forward.1} parent=73 // pred_check
          %p1022 = pneg %p186
        $region84: #{tcanet_forward.1} parent=73 // pred_check_branch
          %1024 = sbr.rel (%p1022) target = $region86
        $region85: #{tcanet_forward.1} parent=73 // pred_region
          #allocation8 [shape = 'u32[6]{0}', space=smem, size = 0x18, scoped, tag = 'DMA stride descriptor']
          %s1025 = smul.u32 2, %s27
          %s1027 = ssub.s32 512, 512
          %1028 = vsyncadd %s1018, %s1027
          %s1029 = smul.addr %s26, 2
          %s1030 = smul.addr %s1025, 8
          %s1031 = sadd.s32 %s1029, %s1030
          %s1032 = smul.addr %s1031, 128
          %s1033 = scalar_lea.hbm %s5, %s1032
          %s1035 = sshll.u32 1, 14
          %s1036 = sxor.u32 4294967295, %s1035
          %s1039 = sshll.u32 7, 18
          %s1040 = sxor.u32 4294967295, %s1039
          %s1041 = sand.u32 0, %s1040
          %s1043 = sor.u32 %s1041, 0
          %s1045 = sshll.u32 3, 24
          %s1046 = sxor.u32 4294967295, %s1045
          %s1047 = sand.u32 %s1043, %s1046
          %s1049 = sor.u32 %s1047, 0
          %s1050 = sshll.u32 %s1021, 4
          %s1051 = int_to_ptr.vmem [resolvable:$true] %s1050
          %1057 = sst [smem:[#allocation8]] 256
          %s1058 = scalar_lea.smem [#allocation8], 1
          %1059 = sst [smem:[%s1058]] 1024
          %s1060 = scalar_lea.smem [#allocation8], 2
          %1061 = sst [smem:[%s1060]] 2
          %s1062 = scalar_lea.smem [#allocation8], 3
          %1063 = sst [smem:[%s1062]] 128
          %s1064 = scalar_lea.smem [#allocation8], 4
          %1065 = sst [smem:[%s1064]] 128
          %s1066 = scalar_lea.smem [#allocation8], 5
          %1067 = sst [smem:[%s1066]] 8
          %1069 = dma.general %s1051, 512, %s1033, %s1018, [#allocation7], [#allocation8], %s1049, 0
        $region86: #{tcanet_forward.1} parent=73 // pred_fallthru
          _
      $region74: #{tcanet_forward.1} parent=5 // pred_fallthru
        _
      %p1070 = scmp.le.s32.totalorder 2, %s17
      // Predicated region
      $region87: #{tcanet_forward.1} parent=5 // pred_check
        %p1071 = pneg %p1070
      $region88: #{tcanet_forward.1} parent=5 // pred_check_branch
        %1073 = sbr.rel (%p1071) target = $region90
      $region89: #{tcanet_forward.1} parent=5 // pred_region
        %s1074 = ssub.s32 %s17, 2
        // Predicated region
        $region91: #{tcanet_forward.1} parent=89 // pred_check
          %p1075 = pneg %p192
        $region92: #{tcanet_forward.1} parent=89 // pred_check_branch
          %1077 = sbr.rel (%p1075) target = $region94
        $region93: #{tcanet_forward.1} parent=89 // pred_region
          %s1078 = sand.u32 %s177, 1
          %s1079 = scalar_lea.sflag [#allocation5], %s1078
          %s1080 = sand.u32 %s177, 1
          %s1081 = smul.addr %s1080, 32
          %s1082 = scalar_lea.vmem [#allocation6], %s1081
          %1083 = dma.done %s1079, 512
        $region94: #{tcanet_forward.1} parent=89 // pred_fallthru
          _
      $region90: #{tcanet_forward.1} parent=5 // pred_fallthru
        _
    $region6: #{tcanet_forward.1} parent=1 // loop_footer
      %s21 = sadd.s32 1, %s17
    $region7: #{tcanet_forward.1} parent=1 // loop_footer_branch
      %16 = sbr.rel target = $region3
    $region8: #{tcanet_forward.1} parent=1 // loop_exit
      _
    %1084 = vsyncpa [#allocation4], 1
    %s1085 = scalar_lea.sflag [#allocation4], 1
    %1086 = vsyncpa %s1085, 1
    %1087 = vsyncpa [#allocation5], 1
    %s1088 = scalar_lea.sflag [#allocation5], 1
    %1089 = vsyncpa %s1088, 1

</llo_original>
